<compile_context>
chip_gen: v7x
topology: tpu7x:2x2x1
jax: 0.10.0
libtpu: 0.0.40
codegen_flags: <defaults>
</compile_context>

<pallas_src>
import functools
import math

import jax
import jax.numpy as jnp
from jax.experimental import pallas as pl
from jax.experimental.pallas import tpu as pltpu

_GELU_C = math.sqrt(2.0 / math.pi)


def _round_up(x: int, m: int) -> int:
    return (x + m - 1) // m * m


def _mlp_kernel(x_ref, w1_ref, b1_ref, w2_ref, b2_ref, o_ref, acc_ref, *,
                gelu_dtype):
    # x_ref : (tm, D)   row tile of tokens (native dtype)
    # w1_ref: (D, th)   c_fc weight chunk
    # b1_ref: (1, th)   c_fc bias chunk
    # w2_ref: (th, D)   c_proj weight chunk
    # b2_ref: (1, D)    c_proj bias
    # o_ref : (tm, D)   output tile
    # acc_ref: (tm, D)  f32 accumulator (VMEM scratch, lives across the H axis)
    hk = pl.program_id(1)

    # c_fc chunk: native-dtype operands straight to the MXU, f32 accumulation.
    h = jnp.dot(x_ref[...], w1_ref[...], preferred_element_type=jnp.float32)
    h = (h + b1_ref[...].astype(jnp.float32)).astype(gelu_dtype)

    # tanh-approx GELU (matches the PyTorch reference); h*h*h keeps it to
    # plain VALU muls.  Runs in bf16 on bf16 inputs (bf16 VALU/EUP), f32 else.
    h3 = h * h * h
    h = 0.5 * h * (1.0 + jnp.tanh(_GELU_C * (h + 0.044715 * h3)))

    # c_proj chunk (accumulated over the H axis).
    contrib = jnp.dot(h.astype(w2_ref.dtype), w2_ref[...],
                      preferred_element_type=jnp.float32)

    @pl.when(hk == 0)
    def _init():
        # First H-chunk: write directly with the output bias folded in —
        # saves the zero-fill pass and the separate finalize bias add.
        acc_ref[...] = contrib + b2_ref[...].astype(jnp.float32)

    @pl.when(hk != 0)
    def _accumulate():
        acc_ref[...] += contrib

    @pl.when(hk == pl.num_programs(1) - 1)
    def _finalize():
        o_ref[...] = acc_ref[...].astype(o_ref.dtype)


def _pick_th(H: int, cap: int) -> int:
    """Largest multiple-of-128 divisor of H that is <= cap; falls back to the
    smallest such divisor, then to the full extent H."""
    divs = [t for t in range(128, H + 1, 128) if H % t == 0]
    if not divs:
        return H
    fitting = [t for t in divs if t <= cap]
    return fitting[-1] if fitting else divs[0]


def _vmem_need(tm, th, D, in_sz, w_sz, out_sz, gelu_sz):
    return (2 * tm * D * in_sz             # x tile (double buffered)
            + 2 * (D + 1) * th * w_sz      # W1 + b1 chunk (double buffered)
            + 2 * th * D * w_sz            # W2 chunk (double buffered)
            + 2 * D * w_sz                 # b2
            + 2 * tm * D * out_sz          # output tile
            + tm * D * 4                   # f32 accumulator scratch
            + tm * th * (4 + gelu_sz))     # live f32 dot result + GELU chunk


def mlp_forward(x, w1, b1, w2, b2, *, tm=None, th=None):
    """x: (B, T, D); w1: (D, H); b1: (H,); w2: (H, D); b2: (D,)."""
    B, T, D = x.shape
    H = w1.shape[1]
    M = B * T

    in_sz = jnp.dtype(x.dtype).itemsize
    w_sz = jnp.dtype(w1.dtype).itemsize
    out_sz = in_sz
    gelu_dtype = jnp.bfloat16 if x.dtype == jnp.bfloat16 else jnp.float32
    gelu_sz = jnp.dtype(gelu_dtype).itemsize

    # --- VMEM budget from this generation's physical capacity. ---
    try:
        vmem_cap = int(pltpu.get_tpu_info().vmem_capacity_bytes)
    except Exception:
        vmem_cap = 64 * 1024 * 1024       # conservative (v7x-sized) fallback
    budget = (vmem_cap * 3) // 4          # ~96 MiB on v5e/v6e, ~48 MiB on v7x

    # --- Row tile (token axis). ---
    if tm is None:
        tm_eff = min(512, _round_up(M, 8))
        # Give both v7x TensorCores work when possible (no effect on v5e/v6e).
        if pl.cdiv(M, tm_eff) < 2 and M > 8:
            tm_eff = _round_up(pl.cdiv(M, 2), 8)
    else:
        tm_eff = max(8, (min(tm, _round_up(M, 8)) // 8) * 8)

    # --- Hidden tile (streamed reduction axis). ---
    if th is None:
        # Keep the weights fully resident when they fit (index_map constant
        # over the single H step -> no re-streaming across row tiles).
        if _vmem_need(tm_eff, H, D, in_sz, w_sz, out_sz, gelu_sz) <= budget:
            th_eff = H
        else:
            th_eff = _pick_th(H, 1024)
    else:
        th_eff = _pick_th(H, th)

    # --- Shrink tiles (th first, then tm) until the working set fits. ---
    while _vmem_need(tm_eff, th_eff, D, in_sz, w_sz, out_sz, gelu_sz) > budget:
        if th_eff > 128:
            smaller = _pick_th(H, max(128, th_eff // 2))
            if smaller < th_eff:
                th_eff = smaller
                continue
        if tm_eff > 8:
            tm_eff = max(8, ((tm_eff // 2) // 8) * 8)
            continue
        break  # minimal tiles; give the compiler the full budget and hope

    x2 = x.reshape(M, D)
    b1_2 = b1.reshape(1, H)
    b2_2 = b2.reshape(1, D)

    grid = (pl.cdiv(M, tm_eff), H // th_eff)

    out2 = pl.pallas_call(
        functools.partial(_mlp_kernel, gelu_dtype=gelu_dtype),
        out_shape=jax.ShapeDtypeStruct((M, D), x.dtype),
        grid_spec=pltpu.PrefetchScalarGridSpec(
            num_scalar_prefetch=0,
            grid=grid,
            in_specs=[
                pl.BlockSpec((tm_eff, D), lambda i, h: (i, 0)),   # x row tile
                pl.BlockSpec((D, th_eff), lambda i, h: (0, h)),   # W1 chunk
                pl.BlockSpec((1, th_eff), lambda i, h: (0, h)),   # b1 chunk
                pl.BlockSpec((th_eff, D), lambda i, h: (h, 0)),   # W2 chunk
                pl.BlockSpec((1, D), lambda i, h: (0, 0)),        # b2
            ],
            out_specs=pl.BlockSpec((tm_eff, D), lambda i, h: (i, 0)),
            scratch_shapes=[pltpu.VMEM((tm_eff, D), jnp.float32)],
        ),
        compiler_params=pltpu.CompilerParams(
            dimension_semantics=("parallel", "arbitrary"),
            vmem_limit_bytes=int(budget),
        ),
    )(x2, w1, b1_2, w2, b2_2)

    return out2.reshape(B, T, D)


def _reference(x, w1, b1, w2, b2):
    h = jnp.einsum("btd,dh->bth", x, w1) + b1
    h = 0.5 * h * (1.0 + jnp.tanh(_GELU_C * (h + 0.044715 * h ** 3)))
    return jnp.einsum("bth,hd->btd", h, w2) + b2


if __name__ == "__main__":
    # Small shapes consistent with the module (embedding_dim D, n_state = 4*D).
    # D is a multiple of 128 so output stores are lane-dense.
    B, T, D = 2, 8, 128
    H = 4 * D  # n_state

    key = jax.random.PRNGKey(0)
    kx, k1, k2 = jax.random.split(key, 3)

    x = jax.random.normal(kx, (B, T, D), dtype=jnp.float32)
    # Conv1D init: normal(std=0.02) weights, zero biases.
    w1 = 0.02 * jax.random.normal(k1, (D, H), dtype=jnp.float32)  # c_fc.w
    b1 = jnp.zeros((H,), dtype=jnp.float32)                        # c_fc.b
    w2 = 0.02 * jax.random.normal(k2, (H, D), dtype=jnp.float32)   # c_proj.w
    b2 = jnp.zeros((D,), dtype=jnp.float32)                        # c_proj.b

    ref = _reference(x, w1, b1, w2, b2)

    # 1) Auto-tiled configuration (resident weights, >=2 row tiles at this M).
    out = jax.block_until_ready(mlp_forward(x, w1, b1, w2, b2))
    assert out.shape == (B, T, D)
    assert jnp.allclose(out, ref, atol=1e-4, rtol=1e-4), "mismatch (default tiles)"

    # 2) Forced multi-chunk H streaming — exercises init/accumulate/finalize.
    out_tiled = jax.block_until_ready(mlp_forward(x, w1, b1, w2, b2, tm=8, th=128))
    assert jnp.allclose(out_tiled, ref, atol=1e-4, rtol=1e-4), "mismatch (tiled H)"

    # 3) Ragged token count — exercises the no-pad masked last row tile.
    x_odd = jax.random.normal(kx, (1, 13, D), dtype=jnp.float32)
    out_odd = jax.block_until_ready(mlp_forward(x_odd, w1, b1, w2, b2))
    ref_odd = _reference(x_odd, w1, b1, w2, b2)
    assert jnp.allclose(out_odd, ref_odd, atol=1e-4, rtol=1e-4), "mismatch (ragged M)"

    # 4) bf16 path — exercises the bf16 GELU chain and downcast store.
    xb = x.astype(jnp.bfloat16)
    w1b, b1b = w1.astype(jnp.bfloat16), b1.astype(jnp.bfloat16)
    w2b, b2b = w2.astype(jnp.bfloat16), b2.astype(jnp.bfloat16)
    out_bf16 = jax.block_until_ready(mlp_forward(xb, w1b, b1b, w2b, b2b))
    ref_bf16 = _reference(xb.astype(jnp.float32), w1b.astype(jnp.float32),
                          b1b.astype(jnp.float32), w2b.astype(jnp.float32),
                          b2b.astype(jnp.float32))
    assert jnp.allclose(out_bf16.astype(jnp.float32), ref_bf16,
                        atol=5e-2, rtol=5e-2), "mismatch (bf16)"

    print("KERNEL_OK")
</pallas_src>

<mosaic_0001>
module attributes {stable_mosaic.version = 11 : i64} {
  func.func @_mlp_kernel(%arg0: i32, %arg1: i32, %arg2: memref<8x128xf32, #tpu.memory_space<vmem>>, %arg3: memref<128x512xf32, #tpu.memory_space<vmem>>, %arg4: memref<1x512xf32, #tpu.memory_space<vmem>>, %arg5: memref<512x128xf32, #tpu.memory_space<vmem>>, %arg6: memref<1x128xf32, #tpu.memory_space<vmem>>, %arg7: memref<8x128xf32, #tpu.memory_space<vmem>>, %arg8: memref<8x128xf32, #tpu.memory_space<vmem>>) attributes {dimension_semantics = [#tpu.dimension_semantics<parallel>, #tpu.dimension_semantics<arbitrary>], iteration_bounds = array<i64: 2, 1>, scalar_prefetch = 0 : i64, scratch_operands = 1 : i64, tpu.core_type = #tpu.core_type<tc>, window_params = [{transform_indices = @transform_0, window_bounds = array<i64: 8, 128>}, {transform_indices = @transform_1, window_bounds = array<i64: 128, 512>}, {transform_indices = @transform_2, window_bounds = array<i64: 1, 512>}, {transform_indices = @transform_3, window_bounds = array<i64: 512, 128>}, {pipeline_mode = #tpu.pipeline_mode<synchronous>, transform_indices = @transform_4, window_bounds = array<i64: 1, 128>}, {transform_indices = @transform_5, window_bounds = array<i64: 8, 128>}]} {
    %c0 = arith.constant 0 : index
    %c0_0 = arith.constant 0 : index
    %0 = vector.load %arg2[%c0, %c0_0] : memref<8x128xf32, #tpu.memory_space<vmem>>, vector<8x128xf32>
    %c0_1 = arith.constant 0 : index
    %c0_2 = arith.constant 0 : index
    %1 = vector.load %arg3[%c0_1, %c0_2] : memref<128x512xf32, #tpu.memory_space<vmem>>, vector<128x512xf32>
    %cst = arith.constant dense<0.000000e+00> : vector<8x512xf32>
    %2 = tpu.matmul %0, %1, %cst {dimension_numbers = #tpu.dot_dimension_numbers<[1], [0], [0], [1], [0, 0, 1, 1], [], []>} : vector<8x128xf32>, vector<128x512xf32>, vector<8x512xf32> -> vector<8x512xf32>
    %c0_3 = arith.constant 0 : index
    %c0_4 = arith.constant 0 : index
    %3 = vector.load %arg4[%c0_3, %c0_4] : memref<1x512xf32, #tpu.memory_space<vmem>>, vector<1x512xf32>
    %4 = vector.broadcast %3 : vector<1x512xf32> to vector<8x512xf32>
    %5 = arith.addf %2, %4 : vector<8x512xf32>
    %6 = arith.mulf %5, %5 : vector<8x512xf32>
    %7 = arith.mulf %6, %5 : vector<8x512xf32>
    %cst_5 = arith.constant 5.000000e-01 : f32
    %8 = vector.broadcast %cst_5 : f32 to vector<8x512xf32>
    %9 = arith.mulf %8, %5 : vector<8x512xf32>
    %cst_6 = arith.constant 4.471500e-02 : f32
    %10 = vector.broadcast %cst_6 : f32 to vector<8x512xf32>
    %11 = arith.mulf %10, %7 : vector<8x512xf32>
    %12 = arith.addf %5, %11 : vector<8x512xf32>
    %cst_7 = arith.constant 0.797884583 : f32
    %13 = vector.broadcast %cst_7 : f32 to vector<8x512xf32>
    %14 = arith.mulf %13, %12 : vector<8x512xf32>
    %15 = math.tanh %14 : vector<8x512xf32>
    %cst_8 = arith.constant 1.000000e+00 : f32
    %16 = vector.broadcast %cst_8 : f32 to vector<8x512xf32>
    %17 = arith.addf %16, %15 : vector<8x512xf32>
    %18 = arith.mulf %9, %17 : vector<8x512xf32>
    %c0_9 = arith.constant 0 : index
    %c0_10 = arith.constant 0 : index
    %19 = vector.load %arg5[%c0_9, %c0_10] : memref<512x128xf32, #tpu.memory_space<vmem>>, vector<512x128xf32>
    %cst_11 = arith.constant dense<0.000000e+00> : vector<8x128xf32>
    %20 = tpu.matmul %18, %19, %cst_11 {dimension_numbers = #tpu.dot_dimension_numbers<[1], [0], [0], [1], [0, 0, 1, 1], [], []>} : vector<8x512xf32>, vector<512x128xf32>, vector<8x128xf32> -> vector<8x128xf32>
    %c0_i32 = arith.constant 0 : i32
    %21 = arith.cmpi eq, %arg1, %c0_i32 : i32
    %22 = arith.extui %21 : i1 to i32
    %c0_i32_12 = arith.constant 0 : i32
    %23 = arith.cmpi ne, %22, %c0_i32_12 : i32
    scf.if %23 {
      %c0_17 = arith.constant 0 : index
      %c0_18 = arith.constant 0 : index
      %30 = vector.load %arg6[%c0_17, %c0_18] : memref<1x128xf32, #tpu.memory_space<vmem>>, vector<1x128xf32>
      %31 = vector.broadcast %30 : vector<1x128xf32> to vector<8x128xf32>
      %32 = arith.addf %20, %31 : vector<8x128xf32>
      %c0_19 = arith.constant 0 : index
      %c0_20 = arith.constant 0 : index
      %33 = vector.load %arg8[%c0_19, %c0_20] : memref<8x128xf32, #tpu.memory_space<vmem>>, vector<8x128xf32>
      tpu.vector_store %arg8[%c0_19, %c0_20], %32 {strides = array<i32>} : memref<8x128xf32, #tpu.memory_space<vmem>>, vector<8x128xf32>,
    } else {
    }
    %c0_i32_13 = arith.constant 0 : i32
    %24 = arith.cmpi ne, %arg1, %c0_i32_13 : i32
    %25 = arith.extui %24 : i1 to i32
    %c0_i32_14 = arith.constant 0 : i32
    %26 = arith.cmpi ne, %25, %c0_i32_14 : i32
    scf.if %26 {
      %c0_17 = arith.constant 0 : index
      %c0_18 = arith.constant 0 : index
      %30 = vector.load %arg8[%c0_17, %c0_18] : memref<8x128xf32, #tpu.memory_space<vmem>>, vector<8x128xf32>
      %31 = arith.addf %30, %20 : vector<8x128xf32>
      %c0_19 = arith.constant 0 : index
      %c0_20 = arith.constant 0 : index
      %32 = vector.load %arg8[%c0_19, %c0_20] : memref<8x128xf32, #tpu.memory_space<vmem>>, vector<8x128xf32>
      tpu.vector_store %arg8[%c0_19, %c0_20], %31 {strides = array<i32>} : memref<8x128xf32, #tpu.memory_space<vmem>>, vector<8x128xf32>,
    } else {
    }
    %c0_i32_15 = arith.constant 0 : i32
    %27 = arith.cmpi eq, %arg1, %c0_i32_15 : i32
    %28 = arith.extui %27 : i1 to i32
    %c0_i32_16 = arith.constant 0 : i32
    %29 = arith.cmpi ne, %28, %c0_i32_16 : i32
    scf.if %29 {
      %c0_17 = arith.constant 0 : index
      %c0_18 = arith.constant 0 : index
      %30 = vector.load %arg8[%c0_17, %c0_18] : memref<8x128xf32, #tpu.memory_space<vmem>>, vector<8x128xf32>
      %c0_19 = arith.constant 0 : index
      %c0_20 = arith.constant 0 : index
      %31 = vector.load %arg7[%c0_19, %c0_20] : memref<8x128xf32, #tpu.memory_space<vmem>>, vector<8x128xf32>
      tpu.vector_store %arg7[%c0_19, %c0_20], %30 {strides = array<i32>} : memref<8x128xf32, #tpu.memory_space<vmem>>, vector<8x128xf32>,
    } else {
    }
    return
  }
  func.func @transform_0(%arg0: i32, %arg1: i32) -> (i32, i32) {
    %c0_i32 = arith.constant 0 : i32
    %c0_i32_0 = arith.constant 0 : i32
    return %arg0, %c0_i32 : i32, i32
  }
  func.func @transform_1(%arg0: i32, %arg1: i32) -> (i32, i32) {
    %c0_i32 = arith.constant 0 : i32
    %c0_i32_0 = arith.constant 0 : i32
    return %c0_i32, %arg1 : i32, i32
  }
  func.func @transform_2(%arg0: i32, %arg1: i32) -> (i32, i32) {
    %c0_i32 = arith.constant 0 : i32
    %c0_i32_0 = arith.constant 0 : i32
    return %c0_i32, %arg1 : i32, i32
  }
  func.func @transform_3(%arg0: i32, %arg1: i32) -> (i32, i32) {
    %c0_i32 = arith.constant 0 : i32
    %c0_i32_0 = arith.constant 0 : i32
    return %arg1, %c0_i32 : i32, i32
  }
  func.func @transform_4(%arg0: i32, %arg1: i32) -> (i32, i32) {
    %c0_i32 = arith.constant 0 : i32
    %c0_i32_0 = arith.constant 0 : i32
    %c0_i32_1 = arith.constant 0 : i32
    return %c0_i32, %c0_i32_0 : i32, i32
  }
  func.func @transform_5(%arg0: i32, %arg1: i32) -> (i32, i32) {
    %c0_i32 = arith.constant 0 : i32
    %c0_i32_0 = arith.constant 0 : i32
    return %arg0, %c0_i32 : i32, i32
  }
}

</mosaic_0001>

<llo_original>
// kernel: tpu_custom_call.1
$region0: #{tpu_custom_call.1}
  #allocation0 [shape = 'u32[]', space=smem, size = 0x4, offset = 0x4, fixed_abs, tag = 'smem constant byte address 0x4 - core index']
  #allocation1 [shape = 'u32[144,128]{1,0:T(1,128)}', space=vmem, size = 0x12000, scoped, tag = 'internal scratch']
  #allocation2 [shape = 'f32[8,128]{1,0:T(8,128)}', space=vmem, size = 0x1000, scoped, tag = 'scratch operand']
  %s0 = inlined_call_operand.hbm [shape: f32[16,128], index: 0, kind: input, shape index: {}]
  %s1 = inlined_call_operand.hbm [shape: f32[128,512], index: 1, kind: input, shape index: {}]
  %s2 = inlined_call_operand.vmem [shape: f32[1,512], index: 2, kind: input, shape index: {}]
  %s3 = inlined_call_operand.hbm [shape: f32[512,128], index: 3, kind: input, shape index: {}]
  %s4 = inlined_call_operand.vmem [shape: f32[1,128], index: 4, kind: input, shape index: {}]
  %s5 = inlined_call_operand.hbm [shape: f32[16,128], index: 5, kind: output, shape index: {}]
  %s6 = sld [smem:[#allocation0]]
  $region77: #{tpu_custom_call.1} parent=0
    _
  %s8 = ssub.s32 1, %s6
  %s9 = scalar_select 0, %s8, %s6
  $region1: #{tpu_custom_call.1} parent=0
    #allocation3 [shape = 'u8[8192]{0}', space=vmem, size = 0x2000, scoped, tag = 'input window, operand 0']
    #allocation4 [shape = 's32[2]{0}', space=sflag, size = 0x8, scoped, tag = 'scoped memory for tpu_custom_call.1']
    #allocation5 [shape = 's32[2]{0}', space=sflag, size = 0x8, scoped, tag = 'scoped memory for tpu_custom_call.1']
    #allocation6 [shape = 'u8[262144]{0}', space=vmem, size = 0x40000, scoped, tag = 'input window, operand 1, single buffered']
    #allocation7 [shape = 's32[1]{0}', space=sflag, size = 0x4, scoped, tag = 'scoped memory for tpu_custom_call.1']
    #allocation8 [shape = 'u8[262144]{0}', space=vmem, size = 0x40000, scoped, tag = 'input window, operand 3, single buffered']
    #allocation9 [shape = 'u8[8192]{0}', space=vmem, size = 0x2000, scoped, tag = 'output window, operand 0']
    %10 = vsyncpa [#allocation4], 0
    %s11 = scalar_lea.sflag [#allocation4], 1
    %12 = vsyncpa %s11, 0
    %13 = vsyncpa [#allocation7], 0
    %14 = vsyncpa [#allocation5], 0
    %s15 = scalar_lea.sflag [#allocation5], 1
    %16 = vsyncpa %s15, 0
    loop: start=0, step=1, limit=4
    $region2: #{tpu_custom_call.1} parent=1 // loop_pre_header
      _
    $region3: #{tpu_custom_call.1} parent=1 // loop_header
      %s18 = sphi 0, %s22
      %p19 = scmp.ge.s32.totalorder %s18, 4
      %s25 = sphi 0, %s37
      %s26 = sphi 0, %s33
      %s27 = sphi 0, %s25
      %s28 = sphi 0, %s26
      %s29 = sphi 0, %s27
      %s30 = sphi 0, %s28
      %s40 = sphi 0, %s42
      %s43 = sphi 0, %s40
      %s44 = sphi 0, %s43
      %s60 = sphi 0, %s44
      %s66 = sphi 0, %s68
      %s69 = sphi 0, %s66
      %s70 = sphi 0, %s69
      %s86 = sphi 0, %s70
      %s92 = sphi 0, %s94
      %s95 = sphi 0, %s92
      %s96 = sphi 0, %s95
      %s112 = sphi 0, %s96
      %s118 = sphi 0, %s120
      %s121 = sphi 0, %s118
      %s122 = sphi 0, %s121
      %s138 = sphi 0, %s122
      %s142 = sphi 0, %s142
      %s144 = sphi 0, %s142
      %s145 = sphi 0, %s144
      %s159 = sphi 0, %s145
      %s165 = sphi 0, %s167
      %s168 = sphi 0, %s165
      %s169 = sphi 0, %s168
      %s185 = sphi 0, %s169
    $region4: #{tpu_custom_call.1} parent=1 // loop_header_branch
      %21 = sbr.rel (%p19) target = $region8
    $region5: #{tpu_custom_call.1} parent=1 // loop_body
      %s23 = ssub.s32 %s18, 1
      %s24 = ssub.s32 %s18, 2
      %s31 = sadd.s32 1, %s26
      %p32 = scmp.ge.s32.totalorder %s31, 1
      %s33 = scalar_select %p32, 0, %s31
      %s34 = sadd.s32 1, %s25
      %s35 = scalar_select %p32, %s34, %s25
      %p36 = scmp.ge.s32.totalorder %s35, 2
      %s37 = scalar_select %p36, 0, %s35
      %s38 = ssub.s32 %s25, %s37
      %p39 = scmp.eq.s32.totalorder %s38, 0
      %s41 = sadd.s32 %s40, 1
      %s42 = scalar_select %p39, %s40, %s41
      %p45 = pneg %p39
      %p46 = scmp.eq.s32.totalorder %s18, 1
      %p47 = por %p45, %p46
      %p48 = scmp.ne.s32.totalorder %s40, %s43
      %p49 = scmp.eq.s32.totalorder %s18, 0
      %p50 = por %p48, %p49
      %p51 = scmp.ne.s32.totalorder %s40, %s43
      %p52 = scmp.eq.s32.totalorder %s23, 1
      %p53 = por %p51, %p52
      %p54 = scmp.ne.s32.totalorder %s43, %s44
      %p55 = scmp.eq.s32.totalorder %s23, 0
      %p56 = por %p54, %p55
      %p57 = scmp.ne.s32.totalorder %s43, %s44
      %p58 = scmp.eq.s32.totalorder %s24, 1
      %p59 = por %p57, %p58
      %p61 = scmp.ne.s32.totalorder %s44, %s60
      %p62 = scmp.eq.s32.totalorder %s24, 0
      %p63 = por %p61, %p62
      %s64 = ssub.s32 %s26, %s33
      %p65 = scmp.eq.s32.totalorder %s64, 0
      %s67 = sadd.s32 %s66, 1
      %s68 = scalar_select %p65, %s66, %s67
      %p71 = pneg %p65
      %p72 = scmp.eq.s32.totalorder %s18, 1
      %p73 = por %p71, %p72
      %p74 = scmp.ne.s32.totalorder %s66, %s69
      %p75 = scmp.eq.s32.totalorder %s18, 0
      %p76 = por %p74, %p75
      %p77 = scmp.ne.s32.totalorder %s66, %s69
      %p78 = scmp.eq.s32.totalorder %s23, 1
      %p79 = por %p77, %p78
      %p80 = scmp.ne.s32.totalorder %s69, %s70
      %p81 = scmp.eq.s32.totalorder %s23, 0
      %p82 = por %p80, %p81
      %p83 = scmp.ne.s32.totalorder %s69, %s70
      %p84 = scmp.eq.s32.totalorder %s24, 1
      %p85 = por %p83, %p84
      %p87 = scmp.ne.s32.totalorder %s70, %s86
      %p88 = scmp.eq.s32.totalorder %s24, 0
      %p89 = por %p87, %p88
      %s90 = ssub.s32 %s26, %s33
      %p91 = scmp.eq.s32.totalorder %s90, 0
      %s93 = sadd.s32 %s92, 1
      %s94 = scalar_select %p91, %s92, %s93
      %p97 = pneg %p91
      %p98 = scmp.eq.s32.totalorder %s18, 1
      %p99 = por %p97, %p98
      %p100 = scmp.ne.s32.totalorder %s92, %s95
      %p101 = scmp.eq.s32.totalorder %s18, 0
      %p102 = por %p100, %p101
      %p103 = scmp.ne.s32.totalorder %s92, %s95
      %p104 = scmp.eq.s32.totalorder %s23, 1
      %p105 = por %p103, %p104
      %p106 = scmp.ne.s32.totalorder %s95, %s96
      %p107 = scmp.eq.s32.totalorder %s23, 0
      %p108 = por %p106, %p107
      %p109 = scmp.ne.s32.totalorder %s95, %s96
      %p110 = scmp.eq.s32.totalorder %s24, 1
      %p111 = por %p109, %p110
      %p113 = scmp.ne.s32.totalorder %s96, %s112
      %p114 = scmp.eq.s32.totalorder %s24, 0
      %p115 = por %p113, %p114
      %s116 = ssub.s32 %s26, %s33
      %p117 = scmp.eq.s32.totalorder %s116, 0
      %s119 = sadd.s32 %s118, 1
      %s120 = scalar_select %p117, %s118, %s119
      %p123 = pneg %p117
      %p124 = scmp.eq.s32.totalorder %s18, 1
      %p125 = por %p123, %p124
      %p126 = scmp.ne.s32.totalorder %s118, %s121
      %p127 = scmp.eq.s32.totalorder %s18, 0
      %p128 = por %p126, %p127
      %p129 = scmp.ne.s32.totalorder %s118, %s121
      %p130 = scmp.eq.s32.totalorder %s23, 1
      %p131 = por %p129, %p130
      %p132 = scmp.ne.s32.totalorder %s121, %s122
      %p133 = scmp.eq.s32.totalorder %s23, 0
      %p134 = por %p132, %p133
      %p135 = scmp.ne.s32.totalorder %s121, %s122
      %p136 = scmp.eq.s32.totalorder %s24, 1
      %p137 = por %p135, %p136
      %p139 = scmp.ne.s32.totalorder %s122, %s138
      %p140 = scmp.eq.s32.totalorder %s24, 0
      %p141 = por %p139, %p140
      %s143 = sadd.s32 %s142, 1
      %p146 = scmp.eq.s32.totalorder %s18, 1
      %p147 = scmp.ne.s32.totalorder %s142, %s144
      %p148 = scmp.eq.s32.totalorder %s18, 0
      %p149 = por %p147, %p148
      %p150 = scmp.ne.s32.totalorder %s142, %s144
      %p151 = scmp.eq.s32.totalorder %s23, 1
      %p152 = por %p150, %p151
      %p153 = scmp.ne.s32.totalorder %s144, %s145
      %p154 = scmp.eq.s32.totalorder %s23, 0
      %p155 = por %p153, %p154
      %p156 = scmp.ne.s32.totalorder %s144, %s145
      %p157 = scmp.eq.s32.totalorder %s24, 1
      %p158 = por %p156, %p157
      %p160 = scmp.ne.s32.totalorder %s145, %s159
      %p161 = scmp.eq.s32.totalorder %s24, 0
      %p162 = por %p160, %p161
      %s163 = ssub.s32 %s25, %s37
      %p164 = scmp.eq.s32.totalorder %s163, 0
      %s166 = sadd.s32 %s165, 1
      %s167 = scalar_select %p164, %s165, %s166
      %p170 = pneg %p164
      %p171 = scmp.eq.s32.totalorder %s18, 1
      %p172 = por %p170, %p171
      %p173 = scmp.ne.s32.totalorder %s165, %s168
      %p174 = scmp.eq.s32.totalorder %s18, 0
      %p175 = por %p173, %p174
      %p176 = scmp.ne.s32.totalorder %s165, %s168
      %p177 = scmp.eq.s32.totalorder %s23, 1
      %p178 = por %p176, %p177
      %p179 = scmp.ne.s32.totalorder %s168, %s169
      %p180 = scmp.eq.s32.totalorder %s23, 0
      %p181 = por %p179, %p180
      %p182 = scmp.ne.s32.totalorder %s168, %s169
      %p183 = scmp.eq.s32.totalorder %s24, 1
      %p184 = por %p182, %p183
      %p186 = scmp.ne.s32.totalorder %s169, %s185
      %p187 = scmp.eq.s32.totalorder %s24, 0
      %p188 = por %p186, %p187
      %p189 = scmp.le.s32.totalorder 1, %s18
      %p190 = scmp.lt.s32.totalorder %s18, 3
      %p191 = pnand %p189, %p190
      %p192 = pneg %p191
      // Predicated region
      $region9: #{tpu_custom_call.1} parent=5 // pred_check
        _
      $region10: #{tpu_custom_call.1} parent=5 // pred_check_branch
        %194 = sbr.rel (%p191) target = $region12
      $region11: #{tpu_custom_call.1} parent=5 // pred_region
        %s195 = ssub.s32 %s18, 1
        // Predicated region
        $region13: #{tpu_custom_call.1} parent=11 // pred_check
          %p196 = pneg %p82
        $region14: #{tpu_custom_call.1} parent=11 // pred_check_branch
          %198 = sbr.rel (%p196) target = $region16
        $region15: #{tpu_custom_call.1} parent=11 // pred_region
          %s199 = smul.u32 4, %s28
          %s201 = ssub.s32 8192, 8192
          %202 = vsyncadd [#allocation7], %s201
          %s203 = smul.addr %s199, 128
          %s204 = scalar_lea.hbm %s1, %s203
          %s205 = sshll.u32 [#allocation6], 4
          %s206 = int_to_ptr.vmem [resolvable:$true] %s205
          %211 = dma.hbm_to_vmem [thread:$0]  %s204, 8192, %s206, [#allocation7], 512, 512, 32
        $region16: #{tpu_custom_call.1} parent=11 // pred_fallthru
          _
        // Predicated region
        $region17: #{tpu_custom_call.1} parent=11 // pred_check
          %p212 = pneg %p108
        $region18: #{tpu_custom_call.1} parent=11 // pred_check_branch
          %214 = sbr.rel (%p212) target = $region20
        $region19: #{tpu_custom_call.1} parent=11 // pred_region
          %s215 = smul.u32 4, %s28
          %p216 = scmp.lt.s32.totalorder %s215, 3
          %s217 = scalar_select %p216, %s215, 3
          %s218 = scalar_lea.vmem %s2, %s217
          %s219 = smul.u32 4, %s28
        $region20: #{tpu_custom_call.1} parent=11 // pred_fallthru
          _
        // Predicated region
        $region21: #{tpu_custom_call.1} parent=11 // pred_check
          %p220 = pneg %p134
        $region22: #{tpu_custom_call.1} parent=11 // pred_check_branch
          %222 = sbr.rel (%p220) target = $region24
        $region23: #{tpu_custom_call.1} parent=11 // pred_region
          %s223 = smul.u32 64, %s28
          %s225 = ssub.s32 8192, 8192
          %226 = vsyncadd [#allocation7], %s225
          %s227 = smul.addr %s223, 128
          %s228 = scalar_lea.hbm %s3, %s227
          %s229 = sshll.u32 [#allocation8], 4
          %s230 = int_to_ptr.vmem [resolvable:$true] %s229
          %235 = dma.hbm_to_vmem [thread:$0]  %s228, 8192, %s230, [#allocation7], 128, 128, 8
        $region24: #{tpu_custom_call.1} parent=11 // pred_fallthru
          _
        // Predicated region
        $region25: #{tpu_custom_call.1} parent=11 // pred_check
          %p236 = pneg %p155
        $region26: #{tpu_custom_call.1} parent=11 // pred_check_branch
          %238 = sbr.rel (%p236) target = $region28
        $region27: #{tpu_custom_call.1} parent=11 // pred_region
          _
        $region28: #{tpu_custom_call.1} parent=11 // pred_fallthru
          _
      $region12: #{tpu_custom_call.1} parent=5 // pred_fallthru
        _
      %p239 = scmp.lt.s32.totalorder %s18, 2
      // Predicated region
      $region29: #{tpu_custom_call.1} parent=5 // pred_check
        %p240 = pneg %p239
      $region30: #{tpu_custom_call.1} parent=5 // pred_check_branch
        %242 = sbr.rel (%p240) target = $region32
      $region31: #{tpu_custom_call.1} parent=5 // pred_region
        // Predicated region
        $region33: #{tpu_custom_call.1} parent=31 // pred_check
          %p243 = pneg %p50
        $region34: #{tpu_custom_call.1} parent=31 // pred_check_branch
          %245 = sbr.rel (%p243) target = $region36
        $region35: #{tpu_custom_call.1} parent=31 // pred_region
          %s246 = sand.u32 %s40, 1
          %s247 = scalar_lea.sflag [#allocation4], %s246
          %s248 = sand.u32 %s40, 1
          %s249 = smul.addr %s248, 8
          %s250 = scalar_lea.vmem [#allocation3], %s249
          %s252 = ssub.s32 128, 128
          %253 = vsyncadd %s247, %s252
          %s254 = smul.addr %s25, 128
          %s255 = scalar_lea.hbm %s0, %s254
          %s257 = sshll.u32 %s250, 4
          %s258 = int_to_ptr.vmem [resolvable:$true] %s257
          %260 = dma.hbm_to_vmem [thread:$0]  %s255, 128, %s258, %s247
        $region36: #{tpu_custom_call.1} parent=31 // pred_fallthru
          _
      $region32: #{tpu_custom_call.1} parent=5 // pred_fallthru
        _
      %p261 = scmp.le.s32.totalorder 1, %s18
      %p262 = scmp.lt.s32.totalorder %s18, 3
      %p263 = pnand %p261, %p262
      %p264 = pneg %p263
      // Predicated region
      $region37: #{tpu_custom_call.1} parent=5 // pred_check
        _
      $region38: #{tpu_custom_call.1} parent=5 // pred_check_branch
        %266 = sbr.rel (%p263) target = $region40
      $region39: #{tpu_custom_call.1} parent=5 // pred_region
        %s267 = ssub.s32 %s18, 1
        %s268 = sand.u32 %s43, 1
        %s269 = scalar_lea.sflag [#allocation4], %s268
        %s270 = sand.u32 %s43, 1
        %s271 = smul.addr %s270, 8
        %s272 = scalar_lea.vmem [#allocation3], %s271
        // Predicated region
        $region41: #{tpu_custom_call.1} parent=39 // pred_check
          %p273 = pneg %p56
        $region42: #{tpu_custom_call.1} parent=39 // pred_check_branch
          %275 = sbr.rel (%p273) target = $region44
        $region43: #{tpu_custom_call.1} parent=39 // pred_region
          %276 = dma.done %s269, 128
        $region44: #{tpu_custom_call.1} parent=39 // pred_fallthru
          _
        // Predicated region
        $region45: #{tpu_custom_call.1} parent=39 // pred_check
          %p277 = pneg %p82
        $region46: #{tpu_custom_call.1} parent=39 // pred_check_branch
          %279 = sbr.rel (%p277) target = $region48
        $region47: #{tpu_custom_call.1} parent=39 // pred_region
          %280 = dma.done [#allocation7], 8192
        $region48: #{tpu_custom_call.1} parent=39 // pred_fallthru
          _
        // Predicated region
        $region49: #{tpu_custom_call.1} parent=39 // pred_check
          %p281 = pneg %p134
        $region50: #{tpu_custom_call.1} parent=39 // pred_check_branch
          %283 = sbr.rel (%p281) target = $region52
        $region51: #{tpu_custom_call.1} parent=39 // pred_region
          %284 = dma.done [#allocation7], 8192
        $region52: #{tpu_custom_call.1} parent=39 // pred_fallthru
          _
        %s285 = sand.u32 %s43, 1
        %s286 = scalar_lea.sflag [#allocation4], %s285
        %s287 = sand.u32 %s43, 1
        %s288 = smul.addr %s287, 8
        %s289 = scalar_lea.vmem [#allocation3], %s288
        %p290 = pneg %p56
        %p291 = pneg %p53
        %p292 = pneg %p82
        %p293 = pneg %p79
        %s294 = smul.u32 4, %s28
        %p295 = scmp.lt.s32.totalorder %s294, 3
        %s296 = scalar_select %p295, %s294, 3
        %s297 = scalar_lea.vmem %s2, %s296
        %p298 = pneg %p108
        %p299 = pneg %p105
        %p300 = pneg %p134
        %p301 = pneg %p131
        %p302 = pneg %p155
        %p303 = pneg %p152
        %p304 = pneg %p181
        %p305 = pneg %p178
        %s306 = sand.u32 %s168, 1
        %s307 = scalar_lea.sflag [#allocation5], %s306
        %s308 = sand.u32 %s168, 1
        %s309 = smul.addr %s308, 8
        %s310 = scalar_lea.vmem [#allocation9], %s309
        %s311 = smul.u32 4, %s28
        %s312 = smul.u32 4, %s28
        %p313 = scmp.lt.s32.totalorder %s312, 3
        %s314 = scalar_select %p313, %s312, 3
        %s315 = scalar_lea.vmem %s2, %s314
        %s316 = smul.u32 4, %s28
        %s317 = smul.u32 64, %s28
        %v318 = vld [vmem:[%s272] sm:$0xff]
        %v319 = vld [vmem:[#allocation6] sm:$0xff]
        %v320 = vld [vmem:[#allocation6 + $0x8] sm:$0xff]
        %v321 = vld [vmem:[#allocation6 + $0x10] sm:$0xff]
        %v322 = vld [vmem:[#allocation6 + $0x18] sm:$0xff]
        %v323 = vld [vmem:[#allocation6 + $0x20] sm:$0xff]
        %v324 = vld [vmem:[#allocation6 + $0x28] sm:$0xff]
        %v325 = vld [vmem:[#allocation6 + $0x30] sm:$0xff]
        %v326 = vld [vmem:[#allocation6 + $0x38] sm:$0xff]
        %v327 = vld [vmem:[#allocation6 + $0x40] sm:$0xff]
        %v328 = vld [vmem:[#allocation6 + $0x48] sm:$0xff]
        %v329 = vld [vmem:[#allocation6 + $0x50] sm:$0xff]
        %v330 = vld [vmem:[#allocation6 + $0x58] sm:$0xff]
        %v331 = vld [vmem:[#allocation6 + $0x60] sm:$0xff]
        %v332 = vld [vmem:[#allocation6 + $0x68] sm:$0xff]
        %v333 = vld [vmem:[#allocation6 + $0x70] sm:$0xff]
        %v334 = vld [vmem:[#allocation6 + $0x78] sm:$0xff]
        %v335 = vld [vmem:[#allocation6 + $0x80] sm:$0xff]
        %v336 = vld [vmem:[#allocation6 + $0x88] sm:$0xff]
        %v337 = vld [vmem:[#allocation6 + $0x90] sm:$0xff]
        %v338 = vld [vmem:[#allocation6 + $0x98] sm:$0xff]
        %v339 = vld [vmem:[#allocation6 + $0xa0] sm:$0xff]
        %v340 = vld [vmem:[#allocation6 + $0xa8] sm:$0xff]
        %v341 = vld [vmem:[#allocation6 + $0xb0] sm:$0xff]
        %v342 = vld [vmem:[#allocation6 + $0xb8] sm:$0xff]
        %v343 = vld [vmem:[#allocation6 + $0xc0] sm:$0xff]
        %v344 = vld [vmem:[#allocation6 + $0xc8] sm:$0xff]
        %v345 = vld [vmem:[#allocation6 + $0xd0] sm:$0xff]
        %v346 = vld [vmem:[#allocation6 + $0xd8] sm:$0xff]
        %v347 = vld [vmem:[#allocation6 + $0xe0] sm:$0xff]
        %v348 = vld [vmem:[#allocation6 + $0xe8] sm:$0xff]
        %v349 = vld [vmem:[#allocation6 + $0xf0] sm:$0xff]
        %v350 = vld [vmem:[#allocation6 + $0xf8] sm:$0xff]
        %v351 = vld [vmem:[#allocation6 + $0x100] sm:$0xff]
        %v352 = vld [vmem:[#allocation6 + $0x108] sm:$0xff]
        %v353 = vld [vmem:[#allocation6 + $0x110] sm:$0xff]
        %v354 = vld [vmem:[#allocation6 + $0x118] sm:$0xff]
        %v355 = vld [vmem:[#allocation6 + $0x120] sm:$0xff]
        %v356 = vld [vmem:[#allocation6 + $0x128] sm:$0xff]
        %v357 = vld [vmem:[#allocation6 + $0x130] sm:$0xff]
        %v358 = vld [vmem:[#allocation6 + $0x138] sm:$0xff]
        %v359 = vld [vmem:[#allocation6 + $0x140] sm:$0xff]
        %v360 = vld [vmem:[#allocation6 + $0x148] sm:$0xff]
        %v361 = vld [vmem:[#allocation6 + $0x150] sm:$0xff]
        %v362 = vld [vmem:[#allocation6 + $0x158] sm:$0xff]
        %v363 = vld [vmem:[#allocation6 + $0x160] sm:$0xff]
        %v364 = vld [vmem:[#allocation6 + $0x168] sm:$0xff]
        %v365 = vld [vmem:[#allocation6 + $0x170] sm:$0xff]
        %v366 = vld [vmem:[#allocation6 + $0x178] sm:$0xff]
        %v367 = vld [vmem:[#allocation6 + $0x180] sm:$0xff]
        %v368 = vld [vmem:[#allocation6 + $0x188] sm:$0xff]
        %v369 = vld [vmem:[#allocation6 + $0x190] sm:$0xff]
        %v370 = vld [vmem:[#allocation6 + $0x198] sm:$0xff]
        %v371 = vld [vmem:[#allocation6 + $0x1a0] sm:$0xff]
        %v372 = vld [vmem:[#allocation6 + $0x1a8] sm:$0xff]
        %v373 = vld [vmem:[#allocation6 + $0x1b0] sm:$0xff]
        %v374 = vld [vmem:[#allocation6 + $0x1b8] sm:$0xff]
        %v375 = vld [vmem:[#allocation6 + $0x1c0] sm:$0xff]
        %v376 = vld [vmem:[#allocation6 + $0x1c8] sm:$0xff]
        %v377 = vld [vmem:[#allocation6 + $0x1d0] sm:$0xff]
        %v378 = vld [vmem:[#allocation6 + $0x1d8] sm:$0xff]
        %v379 = vld [vmem:[#allocation6 + $0x1e0] sm:$0xff]
        %v380 = vld [vmem:[#allocation6 + $0x1e8] sm:$0xff]
        %v381 = vld [vmem:[#allocation6 + $0x1f0] sm:$0xff]
        %v382 = vld [vmem:[#allocation6 + $0x1f8] sm:$0xff]
        %v383 = vld [vmem:[%s315] sm:$0xf]
        %v385 = vlaneseq
        %v386 = vshrl.u32 %v385, 7
        %v387 = vsub.s32 0, %v386
        %v388 = vrot.slane %v383, %v387
        %v389 = vlaneseq
        %v390 = vshrl.u32 %v389, 7
        %v391 = vsub.s32 1, %v390
        %v392 = vrot.slane %v383, %v391
        %v393 = vlaneseq
        %v394 = vshrl.u32 %v393, 7
        %v395 = vsub.s32 2, %v394
        %v396 = vrot.slane %v383, %v395
        %v397 = vlaneseq
        %v398 = vshrl.u32 %v397, 7
        %v399 = vsub.s32 3, %v398
        %v400 = vrot.slane %v383, %v399
        %405 = vmatprep.subr.mxu0 %v320
        %406 = vmatpush1.msra.mxu0 %v319
        %407 = vmatprep.subr.mxu0 %v324
        %408 = vmatpush1.msra.mxu0 %v323
        %409 = vmatprep.subr.mxu0 %v328
        %410 = vmatpush1.msra.mxu0 %v327
        %411 = vmatprep.subr.mxu0 %v332
        %412 = vmatpush1.msra.mxu0 %v331
        %413 = vmatprep.subr.mxu0 %v336
        %414 = vmatpush1.msra.mxu0 %v335
        %415 = vmatprep.subr.mxu0 %v340
        %416 = vmatpush1.msra.mxu0 %v339
        %417 = vmatprep.subr.mxu0 %v344
        %418 = vmatpush1.msra.mxu0 %v343
        %419 = vmatprep.subr.mxu0 %v348
        %420 = vmatpush1.msra.mxu0 %v347
        %421 = vmatprep.subr.mxu0 %v352
        %422 = vmatpush1.msra.mxu0 %v351
        %423 = vmatprep.subr.mxu0 %v356
        %424 = vmatpush1.msra.mxu0 %v355
        %425 = vmatprep.subr.mxu0 %v360
        %426 = vmatpush1.msra.mxu0 %v359
        %427 = vmatprep.subr.mxu0 %v364
        %428 = vmatpush1.msra.mxu0 %v363
        %429 = vmatprep.subr.mxu0 %v368
        %430 = vmatpush1.msra.mxu0 %v367
        %431 = vmatprep.subr.mxu0 %v372
        %432 = vmatpush1.msra.mxu0 %v371
        %433 = vmatprep.subr.mxu0 %v376
        %434 = vmatpush1.msra.mxu0 %v375
        %435 = vmatprep.subr.mxu0 %v380
        %436 = vmatpush1.msra.mxu0 %v379
        %437 = vmatprep.subr.mxu0 0.0
        %438 = vmatpush1.msra.mxu0 0.0
        %439 = vmatprep.subr.mxu0 0.0
        %440 = vmatpush1.msra.mxu0 0.0
        %441 = vmatprep.subr.mxu0 0.0
        %442 = vmatpush1.msra.mxu0 0.0
        %443 = vmatprep.subr.mxu0 0.0
        %444 = vmatpush1.msra.mxu0 0.0
        %445 = vmatprep.subr.mxu0 0.0
        %446 = vmatpush1.msra.mxu0 0.0
        %447 = vmatprep.subr.mxu0 0.0
        %448 = vmatpush1.msra.mxu0 0.0
        %449 = vmatprep.subr.mxu0 0.0
        %450 = vmatpush1.msra.mxu0 0.0
        %451 = vmatprep.subr.mxu0 0.0
        %452 = vmatpush1.msra.mxu0 0.0
        %453 = vmatprep.subr.mxu0 0.0
        %454 = vmatpush1.msra.mxu0 0.0
        %455 = vmatprep.subr.mxu0 0.0
        %456 = vmatpush1.msra.mxu0 0.0
        %457 = vmatprep.subr.mxu0 0.0
        %458 = vmatpush1.msra.mxu0 0.0
        %459 = vmatprep.subr.mxu0 0.0
        %460 = vmatpush1.msra.mxu0 0.0
        %461 = vmatprep.subr.mxu0 0.0
        %462 = vmatpush1.msra.mxu0 0.0
        %463 = vmatprep.subr.mxu0 0.0
        %464 = vmatpush1.msra.mxu0 0.0
        %465 = vmatprep.subr.mxu0 0.0
        %466 = vmatpush1.msra.mxu0 0.0
        %467 = vmatprep.subr.mxu0 0.0
        %468 = vmatpush1.msra.mxu0 0.0
        %469 = vmatprep.mubr.f32.mxu0 0.0
        %470 = vmatmul.mubr.f32.gmra.mrb[0].mxu0 %v318
        %v471 = vpop.f32.mrb[0].mxu0
        %v472 = vadd.f32 %v388, %v471
        %v473 = vpop.f32.mrb[0].mxu0
        %v474 = vadd.f32 %v392, %v473
        %475 = vdwg.mxu0
        %476 = vmatprep.subr.mxu0 %v322
        %477 = vmatpush1.msra.mxu0 %v321
        %478 = vmatprep.subr.mxu0 %v326
        %479 = vmatpush1.msra.mxu0 %v325
        %480 = vmatprep.subr.mxu0 %v330
        %481 = vmatpush1.msra.mxu0 %v329
        %482 = vmatprep.subr.mxu0 %v334
        %483 = vmatpush1.msra.mxu0 %v333
        %484 = vmatprep.subr.mxu0 %v338
        %485 = vmatpush1.msra.mxu0 %v337
        %486 = vmatprep.subr.mxu0 %v342
        %487 = vmatpush1.msra.mxu0 %v341
        %488 = vmatprep.subr.mxu0 %v346
        %489 = vmatpush1.msra.mxu0 %v345
        %490 = vmatprep.subr.mxu0 %v350
        %491 = vmatpush1.msra.mxu0 %v349
        %492 = vmatprep.subr.mxu0 %v354
        %493 = vmatpush1.msra.mxu0 %v353
        %494 = vmatprep.subr.mxu0 %v358
        %495 = vmatpush1.msra.mxu0 %v357
        %496 = vmatprep.subr.mxu0 %v362
        %497 = vmatpush1.msra.mxu0 %v361
        %498 = vmatprep.subr.mxu0 %v366
        %499 = vmatpush1.msra.mxu0 %v365
        %500 = vmatprep.subr.mxu0 %v370
        %501 = vmatpush1.msra.mxu0 %v369
        %502 = vmatprep.subr.mxu0 %v374
        %503 = vmatpush1.msra.mxu0 %v373
        %504 = vmatprep.subr.mxu0 %v378
        %505 = vmatpush1.msra.mxu0 %v377
        %506 = vmatprep.subr.mxu0 %v382
        %507 = vmatpush1.msra.mxu0 %v381
        %508 = vmatprep.subr.mxu0 0.0
        %509 = vmatpush1.msra.mxu0 0.0
        %510 = vmatprep.subr.mxu0 0.0
        %511 = vmatpush1.msra.mxu0 0.0
        %512 = vmatprep.subr.mxu0 0.0
        %513 = vmatpush1.msra.mxu0 0.0
        %514 = vmatprep.subr.mxu0 0.0
        %515 = vmatpush1.msra.mxu0 0.0
        %516 = vmatprep.subr.mxu0 0.0
        %517 = vmatpush1.msra.mxu0 0.0
        %518 = vmatprep.subr.mxu0 0.0
        %519 = vmatpush1.msra.mxu0 0.0
        %520 = vmatprep.subr.mxu0 0.0
        %521 = vmatpush1.msra.mxu0 0.0
        %522 = vmatprep.subr.mxu0 0.0
        %523 = vmatpush1.msra.mxu0 0.0
        %524 = vmatprep.subr.mxu0 0.0
        %525 = vmatpush1.msra.mxu0 0.0
        %526 = vmatprep.subr.mxu0 0.0
        %527 = vmatpush1.msra.mxu0 0.0
        %528 = vmatprep.subr.mxu0 0.0
        %529 = vmatpush1.msra.mxu0 0.0
        %530 = vmatprep.subr.mxu0 0.0
        %531 = vmatpush1.msra.mxu0 0.0
        %532 = vmatprep.subr.mxu0 0.0
        %533 = vmatpush1.msra.mxu0 0.0
        %534 = vmatprep.subr.mxu0 0.0
        %535 = vmatpush1.msra.mxu0 0.0
        %536 = vmatprep.subr.mxu0 0.0
        %537 = vmatpush1.msra.mxu0 0.0
        %538 = vmatprep.subr.mxu0 0.0
        %539 = vmatpush1.msra.mxu0 0.0
        %540 = vmatprep.mubr.f32.mxu0 0.0
        %541 = vmatmul.mubr.f32.gmra.mrb[0].mxu0 %v318
        %v542 = vpop.f32.mrb[0].mxu0
        %v543 = vadd.f32 %v396, %v542
        %v544 = vpop.f32.mrb[0].mxu0
        %v545 = vadd.f32 %v400, %v544
        %546 = vdwg.mxu0
        %v547 = vmul.f32 %v472, %v472
        %v548 = vmul.f32 %v474, %v474
        %v549 = vmul.f32 %v543, %v543
        %v550 = vmul.f32 %v545, %v545
        %v551 = vmul.f32 %v547, %v472
        %v552 = vmul.f32 %v548, %v474
        %v553 = vmul.f32 %v549, %v543
        %v554 = vmul.f32 %v550, %v545
        %v555 = vmul.f32 %v472, 0.5
        %v556 = vmul.f32 %v474, 0.5
        %v557 = vmul.f32 %v543, 0.5
        %v558 = vmul.f32 %v545, 0.5
        %v559 = vmul.f32 %v551, 0.044715
        %v560 = vmul.f32 %v552, 0.044715
        %v561 = vmul.f32 %v553, 0.044715
        %v562 = vmul.f32 %v554, 0.044715
        %v563 = vadd.f32 %v472, %v559
        %v564 = vadd.f32 %v474, %v560
        %v565 = vadd.f32 %v543, %v561
        %v566 = vadd.f32 %v545, %v562
        %v567 = vmul.f32 %v563, 0.7978846
        %v568 = vmul.f32 %v564, 0.7978846
        %v569 = vmul.f32 %v565, 0.7978846
        %v570 = vmul.f32 %v566, 0.7978846
        %v571 = vtanh.pop %v567
        %v572 = vtanh.pop %v568
        %v573 = vtanh.pop %v569
        %v574 = vtanh.pop %v570
        %v575 = vadd.f32 %v571, 1.0
        %v576 = vadd.f32 %v572, 1.0
        %v577 = vadd.f32 %v573, 1.0
        %v578 = vadd.f32 %v574, 1.0
        %v579 = vmul.f32 %v555, %v575
        %v580 = vmul.f32 %v556, %v576
        %v581 = vmul.f32 %v557, %v577
        %v582 = vmul.f32 %v558, %v578
        %v583 = vld [vmem:[#allocation8] sm:$0xff]
        %v584 = vld [vmem:[#allocation8 + $0x8] sm:$0xff]
        %v585 = vld [vmem:[#allocation8 + $0x10] sm:$0xff]
        %v586 = vld [vmem:[#allocation8 + $0x18] sm:$0xff]
        %v587 = vld [vmem:[#allocation8 + $0x20] sm:$0xff]
        %v588 = vld [vmem:[#allocation8 + $0x28] sm:$0xff]
        %v589 = vld [vmem:[#allocation8 + $0x30] sm:$0xff]
        %v590 = vld [vmem:[#allocation8 + $0x38] sm:$0xff]
        %v591 = vld [vmem:[#allocation8 + $0x40] sm:$0xff]
        %v592 = vld [vmem:[#allocation8 + $0x48] sm:$0xff]
        %v593 = vld [vmem:[#allocation8 + $0x50] sm:$0xff]
        %v594 = vld [vmem:[#allocation8 + $0x58] sm:$0xff]
        %v595 = vld [vmem:[#allocation8 + $0x60] sm:$0xff]
        %v596 = vld [vmem:[#allocation8 + $0x68] sm:$0xff]
        %v597 = vld [vmem:[#allocation8 + $0x70] sm:$0xff]
        %v598 = vld [vmem:[#allocation8 + $0x78] sm:$0xff]
        %v599 = vld [vmem:[#allocation8 + $0x80] sm:$0xff]
        %v600 = vld [vmem:[#allocation8 + $0x88] sm:$0xff]
        %v601 = vld [vmem:[#allocation8 + $0x90] sm:$0xff]
        %v602 = vld [vmem:[#allocation8 + $0x98] sm:$0xff]
        %v603 = vld [vmem:[#allocation8 + $0xa0] sm:$0xff]
        %v604 = vld [vmem:[#allocation8 + $0xa8] sm:$0xff]
        %v605 = vld [vmem:[#allocation8 + $0xb0] sm:$0xff]
        %v606 = vld [vmem:[#allocation8 + $0xb8] sm:$0xff]
        %v607 = vld [vmem:[#allocation8 + $0xc0] sm:$0xff]
        %v608 = vld [vmem:[#allocation8 + $0xc8] sm:$0xff]
        %v609 = vld [vmem:[#allocation8 + $0xd0] sm:$0xff]
        %v610 = vld [vmem:[#allocation8 + $0xd8] sm:$0xff]
        %v611 = vld [vmem:[#allocation8 + $0xe0] sm:$0xff]
        %v612 = vld [vmem:[#allocation8 + $0xe8] sm:$0xff]
        %v613 = vld [vmem:[#allocation8 + $0xf0] sm:$0xff]
        %v614 = vld [vmem:[#allocation8 + $0xf8] sm:$0xff]
        %v615 = vld [vmem:[#allocation8 + $0x100] sm:$0xff]
        %v616 = vld [vmem:[#allocation8 + $0x108] sm:$0xff]
        %v617 = vld [vmem:[#allocation8 + $0x110] sm:$0xff]
        %v618 = vld [vmem:[#allocation8 + $0x118] sm:$0xff]
        %v619 = vld [vmem:[#allocation8 + $0x120] sm:$0xff]
        %v620 = vld [vmem:[#allocation8 + $0x128] sm:$0xff]
        %v621 = vld [vmem:[#allocation8 + $0x130] sm:$0xff]
        %v622 = vld [vmem:[#allocation8 + $0x138] sm:$0xff]
        %v623 = vld [vmem:[#allocation8 + $0x140] sm:$0xff]
        %v624 = vld [vmem:[#allocation8 + $0x148] sm:$0xff]
        %v625 = vld [vmem:[#allocation8 + $0x150] sm:$0xff]
        %v626 = vld [vmem:[#allocation8 + $0x158] sm:$0xff]
        %v627 = vld [vmem:[#allocation8 + $0x160] sm:$0xff]
        %v628 = vld [vmem:[#allocation8 + $0x168] sm:$0xff]
        %v629 = vld [vmem:[#allocation8 + $0x170] sm:$0xff]
        %v630 = vld [vmem:[#allocation8 + $0x178] sm:$0xff]
        %v631 = vld [vmem:[#allocation8 + $0x180] sm:$0xff]
        %v632 = vld [vmem:[#allocation8 + $0x188] sm:$0xff]
        %v633 = vld [vmem:[#allocation8 + $0x190] sm:$0xff]
        %v634 = vld [vmem:[#allocation8 + $0x198] sm:$0xff]
        %v635 = vld [vmem:[#allocation8 + $0x1a0] sm:$0xff]
        %v636 = vld [vmem:[#allocation8 + $0x1a8] sm:$0xff]
        %v637 = vld [vmem:[#allocation8 + $0x1b0] sm:$0xff]
        %v638 = vld [vmem:[#allocation8 + $0x1b8] sm:$0xff]
        %v639 = vld [vmem:[#allocation8 + $0x1c0] sm:$0xff]
        %v640 = vld [vmem:[#allocation8 + $0x1c8] sm:$0xff]
        %v641 = vld [vmem:[#allocation8 + $0x1d0] sm:$0xff]
        %v642 = vld [vmem:[#allocation8 + $0x1d8] sm:$0xff]
        %v643 = vld [vmem:[#allocation8 + $0x1e0] sm:$0xff]
        %v644 = vld [vmem:[#allocation8 + $0x1e8] sm:$0xff]
        %v645 = vld [vmem:[#allocation8 + $0x1f0] sm:$0xff]
        %v646 = vld [vmem:[#allocation8 + $0x1f8] sm:$0xff]
        %647 = vmatprep.subr.mxu0 0.0
        %648 = vmatpush1.msra.mxu0 %v583
        %649 = vmatprep.subr.mxu0 0.0
        %650 = vmatpush1.msra.mxu0 %v584
        %651 = vmatprep.subr.mxu0 0.0
        %652 = vmatpush1.msra.mxu0 %v585
        %653 = vmatprep.subr.mxu0 0.0
        %654 = vmatpush1.msra.mxu0 %v586
        %655 = vmatprep.subr.mxu0 0.0
        %656 = vmatpush1.msra.mxu0 %v587
        %657 = vmatprep.subr.mxu0 0.0
        %658 = vmatpush1.msra.mxu0 %v588
        %659 = vmatprep.subr.mxu0 0.0
        %660 = vmatpush1.msra.mxu0 %v589
        %661 = vmatprep.subr.mxu0 0.0
        %662 = vmatpush1.msra.mxu0 %v590
        %663 = vmatprep.subr.mxu0 0.0
        %664 = vmatpush1.msra.mxu0 %v591
        %665 = vmatprep.subr.mxu0 0.0
        %666 = vmatpush1.msra.mxu0 %v592
        %667 = vmatprep.subr.mxu0 0.0
        %668 = vmatpush1.msra.mxu0 %v593
        %669 = vmatprep.subr.mxu0 0.0
        %670 = vmatpush1.msra.mxu0 %v594
        %671 = vmatprep.subr.mxu0 0.0
        %672 = vmatpush1.msra.mxu0 %v595
        %673 = vmatprep.subr.mxu0 0.0
        %674 = vmatpush1.msra.mxu0 %v596
        %675 = vmatprep.subr.mxu0 0.0
        %676 = vmatpush1.msra.mxu0 %v597
        %677 = vmatprep.subr.mxu0 0.0
        %678 = vmatpush1.msra.mxu0 %v598
        %679 = vmatprep.subr.mxu0 0.0
        %680 = vmatpush1.msra.mxu0 %v599
        %681 = vmatprep.subr.mxu0 0.0
        %682 = vmatpush1.msra.mxu0 %v600
        %683 = vmatprep.subr.mxu0 0.0
        %684 = vmatpush1.msra.mxu0 %v601
        %685 = vmatprep.subr.mxu0 0.0
        %686 = vmatpush1.msra.mxu0 %v602
        %687 = vmatprep.subr.mxu0 0.0
        %688 = vmatpush1.msra.mxu0 %v603
        %689 = vmatprep.subr.mxu0 0.0
        %690 = vmatpush1.msra.mxu0 %v604
        %691 = vmatprep.subr.mxu0 0.0
        %692 = vmatpush1.msra.mxu0 %v605
        %693 = vmatprep.subr.mxu0 0.0
        %694 = vmatpush1.msra.mxu0 %v606
        %695 = vmatprep.subr.mxu0 0.0
        %696 = vmatpush1.msra.mxu0 %v607
        %697 = vmatprep.subr.mxu0 0.0
        %698 = vmatpush1.msra.mxu0 %v608
        %699 = vmatprep.subr.mxu0 0.0
        %700 = vmatpush1.msra.mxu0 %v609
        %701 = vmatprep.subr.mxu0 0.0
        %702 = vmatpush1.msra.mxu0 %v610
        %703 = vmatprep.subr.mxu0 0.0
        %704 = vmatpush1.msra.mxu0 %v611
        %705 = vmatprep.subr.mxu0 0.0
        %706 = vmatpush1.msra.mxu0 %v612
        %707 = vmatprep.subr.mxu0 0.0
        %708 = vmatpush1.msra.mxu0 %v613
        %709 = vmatprep.subr.mxu0 0.0
        %710 = vmatpush1.msra.mxu0 %v614
        %711 = vmatprep.mubr.f32.mxu0 %v580
        %712 = vmatmul.mubr.f32.gmra.mrb[0].mxu0 %v579
        %v713 = vpop.f32.mrb[0].mxu0
        %v714 = vadd.f32 0.0, %v713
        %v715 = vpop.f32.mrb[0].mxu0
        %716 = vdwg.mxu0
        %717 = vmatprep.subr.mxu0 0.0
        %718 = vmatpush1.msra.mxu0 %v615
        %719 = vmatprep.subr.mxu0 0.0
        %720 = vmatpush1.msra.mxu0 %v616
        %721 = vmatprep.subr.mxu0 0.0
        %722 = vmatpush1.msra.mxu0 %v617
        %723 = vmatprep.subr.mxu0 0.0
        %724 = vmatpush1.msra.mxu0 %v618
        %725 = vmatprep.subr.mxu0 0.0
        %726 = vmatpush1.msra.mxu0 %v619
        %727 = vmatprep.subr.mxu0 0.0
        %728 = vmatpush1.msra.mxu0 %v620
        %729 = vmatprep.subr.mxu0 0.0
        %730 = vmatpush1.msra.mxu0 %v621
        %731 = vmatprep.subr.mxu0 0.0
        %732 = vmatpush1.msra.mxu0 %v622
        %733 = vmatprep.subr.mxu0 0.0
        %734 = vmatpush1.msra.mxu0 %v623
        %735 = vmatprep.subr.mxu0 0.0
        %736 = vmatpush1.msra.mxu0 %v624
        %737 = vmatprep.subr.mxu0 0.0
        %738 = vmatpush1.msra.mxu0 %v625
        %739 = vmatprep.subr.mxu0 0.0
        %740 = vmatpush1.msra.mxu0 %v626
        %741 = vmatprep.subr.mxu0 0.0
        %742 = vmatpush1.msra.mxu0 %v627
        %743 = vmatprep.subr.mxu0 0.0
        %744 = vmatpush1.msra.mxu0 %v628
        %745 = vmatprep.subr.mxu0 0.0
        %746 = vmatpush1.msra.mxu0 %v629
        %747 = vmatprep.subr.mxu0 0.0
        %748 = vmatpush1.msra.mxu0 %v630
        %749 = vmatprep.subr.mxu0 0.0
        %750 = vmatpush1.msra.mxu0 %v631
        %751 = vmatprep.subr.mxu0 0.0
        %752 = vmatpush1.msra.mxu0 %v632
        %753 = vmatprep.subr.mxu0 0.0
        %754 = vmatpush1.msra.mxu0 %v633
        %755 = vmatprep.subr.mxu0 0.0
        %756 = vmatpush1.msra.mxu0 %v634
        %757 = vmatprep.subr.mxu0 0.0
        %758 = vmatpush1.msra.mxu0 %v635
        %759 = vmatprep.subr.mxu0 0.0
        %760 = vmatpush1.msra.mxu0 %v636
        %761 = vmatprep.subr.mxu0 0.0
        %762 = vmatpush1.msra.mxu0 %v637
        %763 = vmatprep.subr.mxu0 0.0
        %764 = vmatpush1.msra.mxu0 %v638
        %765 = vmatprep.subr.mxu0 0.0
        %766 = vmatpush1.msra.mxu0 %v639
        %767 = vmatprep.subr.mxu0 0.0
        %768 = vmatpush1.msra.mxu0 %v640
        %769 = vmatprep.subr.mxu0 0.0
        %770 = vmatpush1.msra.mxu0 %v641
        %771 = vmatprep.subr.mxu0 0.0
        %772 = vmatpush1.msra.mxu0 %v642
        %773 = vmatprep.subr.mxu0 0.0
        %774 = vmatpush1.msra.mxu0 %v643
        %775 = vmatprep.subr.mxu0 0.0
        %776 = vmatpush1.msra.mxu0 %v644
        %777 = vmatprep.subr.mxu0 0.0
        %778 = vmatpush1.msra.mxu0 %v645
        %779 = vmatprep.subr.mxu0 0.0
        %780 = vmatpush1.msra.mxu0 %v646
        %781 = vmatprep.mubr.f32.mxu0 %v582
        %782 = vmatmul.mubr.f32.gmra.mrb[0].mxu0 %v581
        %v783 = vpop.f32.mrb[0].mxu0
        %v784 = vadd.f32 %v714, %v783
        %v785 = vpop.f32.mrb[0].mxu0
        %786 = vdwg.mxu0
        %p787 = scmp.eq.s32.totalorder %s28, 0
        // Predicated region
        $region53: #{tpu_custom_call.1} parent=39 // pred_check
          %p788 = pneg %p787
        $region54: #{tpu_custom_call.1} parent=39 // pred_check_branch
          %790 = sbr.rel (%p788) target = $region56
        $region55: #{tpu_custom_call.1} parent=39 // pred_region
          %v791 = vld [vmem:[%s4] sm:$0x1]
          %v793 = vlaneseq
          %v794 = vshrl.u32 %v793, 7
          %v795 = vsub.s32 0, %v794
          %v796 = vrot.slane %v791, %v795
          %v798 = vadd.f32 %v784, %v796
          %799 = vst [vmem:[#allocation2] sm:$0xff] %v798
        $region56: #{tpu_custom_call.1} parent=39 // pred_fallthru
          _
        %p800 = scmp.ne.s32.totalorder %s28, 0
        // Predicated region
        $region57: #{tpu_custom_call.1} parent=39 // pred_check
          %p801 = pneg %p800
        $region58: #{tpu_custom_call.1} parent=39 // pred_check_branch
          %803 = sbr.rel (%p801) target = $region60
        $region59: #{tpu_custom_call.1} parent=39 // pred_region
          %v804 = vld [vmem:[#allocation2] sm:$0xff]
          %v805 = vadd.f32 %v804, %v784
          %806 = vst [vmem:[#allocation2] sm:$0xff] %v805
        $region60: #{tpu_custom_call.1} parent=39 // pred_fallthru
          _
        // Predicated region
        $region61: #{tpu_custom_call.1} parent=39 // pred_check
          %p807 = pneg %p787
        $region62: #{tpu_custom_call.1} parent=39 // pred_check_branch
          %809 = sbr.rel (%p807) target = $region64
        $region63: #{tpu_custom_call.1} parent=39 // pred_region
          %v810 = vld [vmem:[#allocation2] sm:$0xff]
          %811 = vst [vmem:[%s310] sm:$0xff] %v810
        $region64: #{tpu_custom_call.1} parent=39 // pred_fallthru
          _
        %s812 = sand.u32 %s168, 1
        %s813 = scalar_lea.sflag [#allocation5], %s812
        %s814 = sand.u32 %s168, 1
        %s815 = smul.addr %s814, 8
        %s816 = scalar_lea.vmem [#allocation9], %s815
        // Predicated region
        $region65: #{tpu_custom_call.1} parent=39 // pred_check
          %p817 = pneg %p178
        $region66: #{tpu_custom_call.1} parent=39 // pred_check_branch
          %819 = sbr.rel (%p817) target = $region68
        $region67: #{tpu_custom_call.1} parent=39 // pred_region
          %s821 = ssub.s32 128, 128
          %822 = vsyncadd %s813, %s821
          %s823 = smul.addr %s27, 128
          %s824 = scalar_lea.hbm %s5, %s823
          %s826 = sshll.u32 %s816, 4
          %s827 = int_to_ptr.vmem [resolvable:$true] %s826
          %829 = dma.vmem_to_hbm [thread:$0]  %s827, 128, %s824, %s813
        $region68: #{tpu_custom_call.1} parent=39 // pred_fallthru
          _
      $region40: #{tpu_custom_call.1} parent=5 // pred_fallthru
        _
      %p830 = scmp.le.s32.totalorder 2, %s18
      // Predicated region
      $region69: #{tpu_custom_call.1} parent=5 // pred_check
        %p831 = pneg %p830
      $region70: #{tpu_custom_call.1} parent=5 // pred_check_branch
        %833 = sbr.rel (%p831) target = $region72
      $region71: #{tpu_custom_call.1} parent=5 // pred_region
        %s834 = ssub.s32 %s18, 2
        // Predicated region
        $region73: #{tpu_custom_call.1} parent=71 // pred_check
          %p835 = pneg %p184
        $region74: #{tpu_custom_call.1} parent=71 // pred_check_branch
          %837 = sbr.rel (%p835) target = $region76
        $region75: #{tpu_custom_call.1} parent=71 // pred_region
          %s838 = sand.u32 %s169, 1
          %s839 = scalar_lea.sflag [#allocation5], %s838
          %s840 = sand.u32 %s169, 1
          %s841 = smul.addr %s840, 8
          %s842 = scalar_lea.vmem [#allocation9], %s841
          %843 = dma.done %s839, 128
        $region76: #{tpu_custom_call.1} parent=71 // pred_fallthru
          _
      $region72: #{tpu_custom_call.1} parent=5 // pred_fallthru
        _
    $region6: #{tpu_custom_call.1} parent=1 // loop_footer
      %s22 = sadd.s32 1, %s18
    $region7: #{tpu_custom_call.1} parent=1 // loop_footer_branch
      %17 = sbr.rel target = $region3
    $region8: #{tpu_custom_call.1} parent=1 // loop_exit
      _
    %844 = vsyncpa [#allocation4], 1
    %s845 = scalar_lea.sflag [#allocation4], 1
    %846 = vsyncpa %s845, 1
    %847 = vsyncpa [#allocation7], 1
    %848 = vsyncpa [#allocation5], 1
    %s849 = scalar_lea.sflag [#allocation5], 1
    %850 = vsyncpa %s849, 1

</llo_original>
